<compile_context>
chip_gen: v5e
topology: v5e:2x2
jax: 0.10.0
libtpu: 0.0.40
codegen_flags: <defaults>
</compile_context>

<pallas_src>
import math
import jax
import jax.numpy as jnp
from jax.experimental import pallas as pl
from jax.experimental.pallas import tpu as pltpu

IN_DIM = 4
HIDDEN_DIM = 50
OUT_DIM = 2
N_LAYERS = 9          # 4->H, 7x (H->H), H->2

PAD_IN = 8            # pad input features 4 -> 8 (sublane-friendly K for layer 1)
PAD_H = 128           # pad hidden features to one full lane dim


def _round_up(n, m):
    return ((n + m - 1) // m) * m


def _mlp_kernel(x_ref, w_first_ref, w_rest_ref, b_ref, out_ref):
    """One batch tile through all 9 layers (feature-padded with exact zeros).

    x_ref:       (TB, PAD_IN)  f32          current batch tile
    w_first_ref: (PAD_IN, PAD_H)            layer-1 weight, grid-resident (bf16 or f32)
    w_rest_ref:  (N_LAYERS-1, PAD_H, PAD_H) layers 2..9 packed, grid-resident
    b_ref:       (N_LAYERS, PAD_H) f32      all biases packed, grid-resident
    out_ref:     (TB, OUT_DIM) f32          narrow output (2 valid columns)
    """
    cdt = w_first_ref.dtype   # compute dtype fed to the MXU (bf16 default)

    # Layer 1: (TB, 8) x (8, 128).  Cast activation to the weight dtype right at
    # the dot input; accumulate in f32; bias/ReLU in f32.
    h = jnp.dot(x_ref[...].astype(cdt), w_first_ref[...],
                preferred_element_type=jnp.float32)
    h = jnp.maximum(h + b_ref[pl.ds(0, 1), :], 0.0)

    for i in range(1, N_LAYERS):
        h = jnp.dot(h.astype(cdt), w_rest_ref[i - 1],   # static index, (128,128)
                    preferred_element_type=jnp.float32)
        h = h + b_ref[pl.ds(i, 1), :]
        if i < N_LAYERS - 1:
            h = jnp.maximum(h, 0.0)                     # ReLU between layers only

    out_ref[...] = h[:, :OUT_DIM].astype(out_ref.dtype)


def pack_params(weights, biases, weight_dtype=jnp.bfloat16):
    """Zero-pad and stack the 9 (in,out) weights / biases into 3 aligned tensors."""
    dims = [IN_DIM] + [HIDDEN_DIM] * (N_LAYERS - 1) + [OUT_DIM]
    w_first = jnp.zeros((PAD_IN, PAD_H), weight_dtype)
    w_first = w_first.at[:IN_DIM, :HIDDEN_DIM].set(weights[0].astype(weight_dtype))
    w_rest = jnp.zeros((N_LAYERS - 1, PAD_H, PAD_H), weight_dtype)
    b_pack = jnp.zeros((N_LAYERS, PAD_H), jnp.float32)
    b_pack = b_pack.at[0, :dims[1]].set(biases[0].astype(jnp.float32))
    for i in range(1, N_LAYERS):
        fi, fo = dims[i], dims[i + 1]
        w_rest = w_rest.at[i - 1, :fi, :fo].set(weights[i].astype(weight_dtype))
        b_pack = b_pack.at[i, :fo].set(biases[i].astype(jnp.float32))
    return w_first, w_rest, b_pack


def _choose_batch_tiling(B, batch_tile):
    """Split round_up(B, 8) rows as evenly as possible into <=batch_tile tiles.

    Guarantees: TB is a multiple of 8, TB <= batch_tile, TB * n_tiles >= B,
    and n_tiles >= 2 when the batch is big enough to be worth sharding over
    two TensorCores (v7x megacore)."""
    batch_tile = max(8, _round_up(batch_tile, 8))
    B8 = _round_up(max(B, 1), 8)
    n_tiles = max(1, -(-B8 // batch_tile))        # ceil div
    if n_tiles == 1 and B8 >= 64:                 # ensure >=2 grid steps on v7x
        n_tiles = 2
    TB = _round_up(-(-B8 // n_tiles), 8)          # even split, multiple of 8
    Bp = TB * n_tiles
    return TB, Bp, n_tiles


def nine_layer_relu_mlp(x, weights, biases, *, batch_tile=1024,
                        weight_dtype=jnp.bfloat16):
    """x: (B, ...) flattened to (B, 4). Returns (B, 2) float32."""
    B = x.shape[0]
    x2d = x.reshape(B, -1).astype(jnp.float32)
    assert x2d.shape[1] == IN_DIM, f"flattened feature dim must be {IN_DIM}"

    TB, Bp, n_tiles = _choose_batch_tiling(B, batch_tile)
    x_pad = jnp.zeros((Bp, PAD_IN), jnp.float32).at[:B, :IN_DIM].set(x2d)

    w_first, w_rest, b_pack = pack_params(weights, biases, weight_dtype)

    grid = (n_tiles,)

    # Scheduler hints.
    flops = 2 * B * (IN_DIM * HIDDEN_DIM
                     + (N_LAYERS - 2) * HIDDEN_DIM * HIDDEN_DIM
                     + HIDDEN_DIM * OUT_DIM)
    param_bytes = (w_first.size * w_first.dtype.itemsize
                   + w_rest.size * w_rest.dtype.itemsize
                   + b_pack.size * b_pack.dtype.itemsize)
    bytes_accessed = x_pad.size * 4 + Bp * OUT_DIM * 4 + param_bytes

    out_padded = pl.pallas_call(
        _mlp_kernel,
        out_shape=jax.ShapeDtypeStruct((Bp, OUT_DIM), jnp.float32),
        grid=grid,
        in_specs=[
            pl.BlockSpec((TB, PAD_IN), lambda i: (i, 0)),                     # x tile
            pl.BlockSpec((PAD_IN, PAD_H), lambda i: (0, 0)),                  # w_first (resident)
            pl.BlockSpec((N_LAYERS - 1, PAD_H, PAD_H), lambda i: (0, 0, 0)),  # w_rest (resident)
            pl.BlockSpec((N_LAYERS, PAD_H), lambda i: (0, 0)),                # biases (resident)
        ],
        out_specs=pl.BlockSpec((TB, OUT_DIM), lambda i: (i, 0)),              # narrow (TB, 2) out
        compiler_params=pltpu.CompilerParams(
            dimension_semantics=("parallel",),        # shard batch grid over TCs (v7x)
            vmem_limit_bytes=32 * 1024 * 1024,        # safe on v5e/v6e/v7x; >> footprint
        ),
        cost_estimate=pl.CostEstimate(flops=flops, transcendentals=0,
                                      bytes_accessed=bytes_accessed),
    )(x_pad, w_first, w_rest, b_pack)

    return out_padded[:B, :]


def init_params(key, hidden_dim=HIDDEN_DIM):
    """He (kaiming_uniform_, a=0 -> gain=sqrt(2)) init like the PyTorch module;
    biases filled with 0.01. Weights stored as (in, out)."""
    dims = [IN_DIM] + [hidden_dim] * (N_LAYERS - 1) + [OUT_DIM]
    weights, biases = [], []
    for i in range(N_LAYERS):
        fan_in, fan_out = dims[i], dims[i + 1]
        key, sub = jax.random.split(key)
        bound = math.sqrt(6.0 / fan_in)  # gain*sqrt(3/fan_in), gain=sqrt(2)
        w_pt = jax.random.uniform(sub, (fan_out, fan_in), jnp.float32, -bound, bound)
        weights.append(w_pt.T)           # PyTorch weight is (out, in); store (in, out)
        biases.append(jnp.full((fan_out,), 0.01, jnp.float32))
    return weights, biases


def reference_forward(x, weights, biases):
    """Pure-JAX f32 reference matching the PyTorch forward."""
    h = x.reshape(x.shape[0], -1).astype(jnp.float32)
    for i, (w, b) in enumerate(zip(weights, biases)):
        h = h @ w + b
        if i < N_LAYERS - 1:
            h = jnp.maximum(h, 0.0)
    return h


if __name__ == "__main__":
    key = jax.random.PRNGKey(0)
    pkey, xkey = jax.random.split(key)
    weights, biases = init_params(pkey)

    # Small input; nn.Flatten() -> Linear(4, hidden) implies flattened feature dim 4.
    x = jax.random.normal(xkey, (2, 2, 2), jnp.float32)
    ref = reference_forward(x, weights, biases)

    # Default (native bf16 MXU) path — looser tolerance vs the f32 reference.
    out_bf16 = jax.block_until_ready(nine_layer_relu_mlp(x, weights, biases))
    assert out_bf16.shape == (2, OUT_DIM)
    assert jnp.allclose(out_bf16, ref, atol=2e-2, rtol=2e-2), "bf16-path mismatch vs reference"

    # f32 path — bit-tight comparison.
    out_f32 = jax.block_until_ready(
        nine_layer_relu_mlp(x, weights, biases, weight_dtype=jnp.float32))
    assert jnp.allclose(out_f32, ref, atol=1e-4, rtol=1e-4), "f32-path mismatch vs reference"

    # Multi-tile grid + even-split tiling path: 272 rows -> TB=136, grid=(2,), no waste rows.
    xkey2 = jax.random.split(xkey)[0]
    xb = jax.random.normal(xkey2, (272, IN_DIM), jnp.float32)
    refb = reference_forward(xb, weights, biases)
    outb = jax.block_until_ready(nine_layer_relu_mlp(xb, weights, biases))
    assert outb.shape == (272, OUT_DIM)
    assert jnp.allclose(outb, refb, atol=2e-2, rtol=2e-2), "bf16-path mismatch (batched)"
    outb_f32 = jax.block_until_ready(
        nine_layer_relu_mlp(xb, weights, biases, weight_dtype=jnp.float32))
    assert jnp.allclose(outb_f32, refb, atol=1e-4, rtol=1e-4), "f32-path mismatch (batched)"

    print("KERNEL_OK")
</pallas_src>

<mosaic_0001>
module attributes {stable_mosaic.version = 11 : i64} {
  func.func @_mlp_kernel(%arg0: i32, %arg1: memref<8x8xf32, #tpu.memory_space<vmem>>, %arg2: memref<8x128xbf16, #tpu.memory_space<vmem>>, %arg3: memref<8x128x128xbf16, #tpu.memory_space<vmem>>, %arg4: memref<9x128xf32, #tpu.memory_space<vmem>>, %arg5: memref<8x2xf32, #tpu.memory_space<vmem>>) attributes {dimension_semantics = [#tpu.dimension_semantics<parallel>], iteration_bounds = array<i64: 1>, scalar_prefetch = 0 : i64, scratch_operands = 0 : i64, tpu.core_type = #tpu.core_type<tc>, window_params = [{transform_indices = @transform_0, window_bounds = array<i64: 8, 8>}, {pipeline_mode = #tpu.pipeline_mode<synchronous>, transform_indices = @transform_1, window_bounds = array<i64: 8, 128>}, {pipeline_mode = #tpu.pipeline_mode<synchronous>, transform_indices = @transform_2, window_bounds = array<i64: 8, 128, 128>}, {pipeline_mode = #tpu.pipeline_mode<synchronous>, transform_indices = @transform_3, window_bounds = array<i64: 9, 128>}, {transform_indices = @transform_4, window_bounds = array<i64: 8, 2>}]} {
    %c0 = arith.constant 0 : index
    %c0_0 = arith.constant 0 : index
    %0 = vector.load %arg1[%c0, %c0_0] : memref<8x8xf32, #tpu.memory_space<vmem>>, vector<8x8xf32>
    %1 = arith.truncf %0 : vector<8x8xf32> to vector<8x8xbf16>
    %c0_1 = arith.constant 0 : index
    %c0_2 = arith.constant 0 : index
    %2 = vector.load %arg2[%c0_1, %c0_2] : memref<8x128xbf16, #tpu.memory_space<vmem>>, vector<8x128xbf16>
    %cst = arith.constant dense<0.000000e+00> : vector<8x128xf32>
    %3 = tpu.matmul %1, %2, %cst {dimension_numbers = #tpu.dot_dimension_numbers<[1], [0], [0], [1], [0, 0, 1, 1], [], []>} : vector<8x8xbf16>, vector<8x128xbf16>, vector<8x128xf32> -> vector<8x128xf32>
    %c0_3 = arith.constant 0 : index
    %c0_4 = arith.constant 0 : index
    %4 = vector.load %arg4[%c0_3, %c0_4] : memref<9x128xf32, #tpu.memory_space<vmem>>, vector<1x128xf32>
    %5 = vector.broadcast %4 : vector<1x128xf32> to vector<8x128xf32>
    %6 = arith.addf %3, %5 : vector<8x128xf32>
    %cst_5 = arith.constant 0.000000e+00 : f32
    %7 = vector.broadcast %cst_5 : f32 to vector<8x128xf32>
    %8 = arith.maximumf %6, %7 : vector<8x128xf32>
    %9 = arith.truncf %8 : vector<8x128xf32> to vector<8x128xbf16>
    %c0_6 = arith.constant 0 : index
    %c0_7 = arith.constant 0 : index
    %c0_8 = arith.constant 0 : index
    %10 = vector.load %arg3[%c0_6, %c0_7, %c0_8] : memref<8x128x128xbf16, #tpu.memory_space<vmem>>, vector<1x128x128xbf16>
    %11 = vector.shape_cast %10 : vector<1x128x128xbf16> to vector<128x128xbf16>
    %cst_9 = arith.constant dense<0.000000e+00> : vector<8x128xf32>
    %12 = tpu.matmul %9, %11, %cst_9 {dimension_numbers = #tpu.dot_dimension_numbers<[1], [0], [0], [1], [0, 0, 1, 1], [], []>} : vector<8x128xbf16>, vector<128x128xbf16>, vector<8x128xf32> -> vector<8x128xf32>
    %c1 = arith.constant 1 : index
    %c0_10 = arith.constant 0 : index
    %13 = vector.load %arg4[%c1, %c0_10] : memref<9x128xf32, #tpu.memory_space<vmem>>, vector<1x128xf32>
    %14 = vector.broadcast %13 : vector<1x128xf32> to vector<8x128xf32>
    %15 = arith.addf %12, %14 : vector<8x128xf32>
    %cst_11 = arith.constant 0.000000e+00 : f32
    %16 = vector.broadcast %cst_11 : f32 to vector<8x128xf32>
    %17 = arith.maximumf %15, %16 : vector<8x128xf32>
    %18 = arith.truncf %17 : vector<8x128xf32> to vector<8x128xbf16>
    %c1_12 = arith.constant 1 : index
    %c0_13 = arith.constant 0 : index
    %c0_14 = arith.constant 0 : index
    %19 = vector.load %arg3[%c1_12, %c0_13, %c0_14] : memref<8x128x128xbf16, #tpu.memory_space<vmem>>, vector<1x128x128xbf16>
    %20 = vector.shape_cast %19 : vector<1x128x128xbf16> to vector<128x128xbf16>
    %cst_15 = arith.constant dense<0.000000e+00> : vector<8x128xf32>
    %21 = tpu.matmul %18, %20, %cst_15 {dimension_numbers = #tpu.dot_dimension_numbers<[1], [0], [0], [1], [0, 0, 1, 1], [], []>} : vector<8x128xbf16>, vector<128x128xbf16>, vector<8x128xf32> -> vector<8x128xf32>
    %c2 = arith.constant 2 : index
    %c0_16 = arith.constant 0 : index
    %22 = vector.load %arg4[%c2, %c0_16] : memref<9x128xf32, #tpu.memory_space<vmem>>, vector<1x128xf32>
    %23 = vector.broadcast %22 : vector<1x128xf32> to vector<8x128xf32>
    %24 = arith.addf %21, %23 : vector<8x128xf32>
    %cst_17 = arith.constant 0.000000e+00 : f32
    %25 = vector.broadcast %cst_17 : f32 to vector<8x128xf32>
    %26 = arith.maximumf %24, %25 : vector<8x128xf32>
    %27 = arith.truncf %26 : vector<8x128xf32> to vector<8x128xbf16>
    %c2_18 = arith.constant 2 : index
    %c0_19 = arith.constant 0 : index
    %c0_20 = arith.constant 0 : index
    %28 = vector.load %arg3[%c2_18, %c0_19, %c0_20] : memref<8x128x128xbf16, #tpu.memory_space<vmem>>, vector<1x128x128xbf16>
    %29 = vector.shape_cast %28 : vector<1x128x128xbf16> to vector<128x128xbf16>
    %cst_21 = arith.constant dense<0.000000e+00> : vector<8x128xf32>
    %30 = tpu.matmul %27, %29, %cst_21 {dimension_numbers = #tpu.dot_dimension_numbers<[1], [0], [0], [1], [0, 0, 1, 1], [], []>} : vector<8x128xbf16>, vector<128x128xbf16>, vector<8x128xf32> -> vector<8x128xf32>
    %c3 = arith.constant 3 : index
    %c0_22 = arith.constant 0 : index
    %31 = vector.load %arg4[%c3, %c0_22] : memref<9x128xf32, #tpu.memory_space<vmem>>, vector<1x128xf32>
    %32 = vector.broadcast %31 : vector<1x128xf32> to vector<8x128xf32>
    %33 = arith.addf %30, %32 : vector<8x128xf32>
    %cst_23 = arith.constant 0.000000e+00 : f32
    %34 = vector.broadcast %cst_23 : f32 to vector<8x128xf32>
    %35 = arith.maximumf %33, %34 : vector<8x128xf32>
    %36 = arith.truncf %35 : vector<8x128xf32> to vector<8x128xbf16>
    %c3_24 = arith.constant 3 : index
    %c0_25 = arith.constant 0 : index
    %c0_26 = arith.constant 0 : index
    %37 = vector.load %arg3[%c3_24, %c0_25, %c0_26] : memref<8x128x128xbf16, #tpu.memory_space<vmem>>, vector<1x128x128xbf16>
    %38 = vector.shape_cast %37 : vector<1x128x128xbf16> to vector<128x128xbf16>
    %cst_27 = arith.constant dense<0.000000e+00> : vector<8x128xf32>
    %39 = tpu.matmul %36, %38, %cst_27 {dimension_numbers = #tpu.dot_dimension_numbers<[1], [0], [0], [1], [0, 0, 1, 1], [], []>} : vector<8x128xbf16>, vector<128x128xbf16>, vector<8x128xf32> -> vector<8x128xf32>
    %c4 = arith.constant 4 : index
    %c0_28 = arith.constant 0 : index
    %40 = vector.load %arg4[%c4, %c0_28] : memref<9x128xf32, #tpu.memory_space<vmem>>, vector<1x128xf32>
    %41 = vector.broadcast %40 : vector<1x128xf32> to vector<8x128xf32>
    %42 = arith.addf %39, %41 : vector<8x128xf32>
    %cst_29 = arith.constant 0.000000e+00 : f32
    %43 = vector.broadcast %cst_29 : f32 to vector<8x128xf32>
    %44 = arith.maximumf %42, %43 : vector<8x128xf32>
    %45 = arith.truncf %44 : vector<8x128xf32> to vector<8x128xbf16>
    %c4_30 = arith.constant 4 : index
    %c0_31 = arith.constant 0 : index
    %c0_32 = arith.constant 0 : index
    %46 = vector.load %arg3[%c4_30, %c0_31, %c0_32] : memref<8x128x128xbf16, #tpu.memory_space<vmem>>, vector<1x128x128xbf16>
    %47 = vector.shape_cast %46 : vector<1x128x128xbf16> to vector<128x128xbf16>
    %cst_33 = arith.constant dense<0.000000e+00> : vector<8x128xf32>
    %48 = tpu.matmul %45, %47, %cst_33 {dimension_numbers = #tpu.dot_dimension_numbers<[1], [0], [0], [1], [0, 0, 1, 1], [], []>} : vector<8x128xbf16>, vector<128x128xbf16>, vector<8x128xf32> -> vector<8x128xf32>
    %c5 = arith.constant 5 : index
    %c0_34 = arith.constant 0 : index
    %49 = vector.load %arg4[%c5, %c0_34] : memref<9x128xf32, #tpu.memory_space<vmem>>, vector<1x128xf32>
    %50 = vector.broadcast %49 : vector<1x128xf32> to vector<8x128xf32>
    %51 = arith.addf %48, %50 : vector<8x128xf32>
    %cst_35 = arith.constant 0.000000e+00 : f32
    %52 = vector.broadcast %cst_35 : f32 to vector<8x128xf32>
    %53 = arith.maximumf %51, %52 : vector<8x128xf32>
    %54 = arith.truncf %53 : vector<8x128xf32> to vector<8x128xbf16>
    %c5_36 = arith.constant 5 : index
    %c0_37 = arith.constant 0 : index
    %c0_38 = arith.constant 0 : index
    %55 = vector.load %arg3[%c5_36, %c0_37, %c0_38] : memref<8x128x128xbf16, #tpu.memory_space<vmem>>, vector<1x128x128xbf16>
    %56 = vector.shape_cast %55 : vector<1x128x128xbf16> to vector<128x128xbf16>
    %cst_39 = arith.constant dense<0.000000e+00> : vector<8x128xf32>
    %57 = tpu.matmul %54, %56, %cst_39 {dimension_numbers = #tpu.dot_dimension_numbers<[1], [0], [0], [1], [0, 0, 1, 1], [], []>} : vector<8x128xbf16>, vector<128x128xbf16>, vector<8x128xf32> -> vector<8x128xf32>
    %c6 = arith.constant 6 : index
    %c0_40 = arith.constant 0 : index
    %58 = vector.load %arg4[%c6, %c0_40] : memref<9x128xf32, #tpu.memory_space<vmem>>, vector<1x128xf32>
    %59 = vector.broadcast %58 : vector<1x128xf32> to vector<8x128xf32>
    %60 = arith.addf %57, %59 : vector<8x128xf32>
    %cst_41 = arith.constant 0.000000e+00 : f32
    %61 = vector.broadcast %cst_41 : f32 to vector<8x128xf32>
    %62 = arith.maximumf %60, %61 : vector<8x128xf32>
    %63 = arith.truncf %62 : vector<8x128xf32> to vector<8x128xbf16>
    %c6_42 = arith.constant 6 : index
    %c0_43 = arith.constant 0 : index
    %c0_44 = arith.constant 0 : index
    %64 = vector.load %arg3[%c6_42, %c0_43, %c0_44] : memref<8x128x128xbf16, #tpu.memory_space<vmem>>, vector<1x128x128xbf16>
    %65 = vector.shape_cast %64 : vector<1x128x128xbf16> to vector<128x128xbf16>
    %cst_45 = arith.constant dense<0.000000e+00> : vector<8x128xf32>
    %66 = tpu.matmul %63, %65, %cst_45 {dimension_numbers = #tpu.dot_dimension_numbers<[1], [0], [0], [1], [0, 0, 1, 1], [], []>} : vector<8x128xbf16>, vector<128x128xbf16>, vector<8x128xf32> -> vector<8x128xf32>
    %c7 = arith.constant 7 : index
    %c0_46 = arith.constant 0 : index
    %67 = vector.load %arg4[%c7, %c0_46] : memref<9x128xf32, #tpu.memory_space<vmem>>, vector<1x128xf32>
    %68 = vector.broadcast %67 : vector<1x128xf32> to vector<8x128xf32>
    %69 = arith.addf %66, %68 : vector<8x128xf32>
    %cst_47 = arith.constant 0.000000e+00 : f32
    %70 = vector.broadcast %cst_47 : f32 to vector<8x128xf32>
    %71 = arith.maximumf %69, %70 : vector<8x128xf32>
    %72 = arith.truncf %71 : vector<8x128xf32> to vector<8x128xbf16>
    %c7_48 = arith.constant 7 : index
    %c0_49 = arith.constant 0 : index
    %c0_50 = arith.constant 0 : index
    %73 = vector.load %arg3[%c7_48, %c0_49, %c0_50] : memref<8x128x128xbf16, #tpu.memory_space<vmem>>, vector<1x128x128xbf16>
    %74 = vector.shape_cast %73 : vector<1x128x128xbf16> to vector<128x128xbf16>
    %cst_51 = arith.constant dense<0.000000e+00> : vector<8x128xf32>
    %75 = tpu.matmul %72, %74, %cst_51 {dimension_numbers = #tpu.dot_dimension_numbers<[1], [0], [0], [1], [0, 0, 1, 1], [], []>} : vector<8x128xbf16>, vector<128x128xbf16>, vector<8x128xf32> -> vector<8x128xf32>
    %c8 = arith.constant 8 : index
    %c0_52 = arith.constant 0 : index
    %76 = vector.load %arg4[%c8, %c0_52] : memref<9x128xf32, #tpu.memory_space<vmem>>, vector<1x128xf32>
    %77 = vector.broadcast %76 : vector<1x128xf32> to vector<8x128xf32>
    %78 = arith.addf %75, %77 : vector<8x128xf32>
    %79 = vector.extract_strided_slice %78 {offsets = [0, 0], sizes = [8, 2], strides = [1, 1]} : vector<8x128xf32> to vector<8x2xf32>
    %c0_53 = arith.constant 0 : index
    %c0_54 = arith.constant 0 : index
    %80 = vector.load %arg5[%c0_53, %c0_54] : memref<8x2xf32, #tpu.memory_space<vmem>>, vector<8x2xf32>
    tpu.vector_store %arg5[%c0_53, %c0_54], %79 {strides = array<i32>} : memref<8x2xf32, #tpu.memory_space<vmem>>, vector<8x2xf32>,
    return
  }
  func.func @transform_0(%arg0: i32) -> (i32, i32) {
    %c0_i32 = arith.constant 0 : i32
    %c0_i32_0 = arith.constant 0 : i32
    return %arg0, %c0_i32 : i32, i32
  }
  func.func @transform_1(%arg0: i32) -> (i32, i32) {
    %c0_i32 = arith.constant 0 : i32
    %c0_i32_0 = arith.constant 0 : i32
    %c0_i32_1 = arith.constant 0 : i32
    return %c0_i32, %c0_i32_0 : i32, i32
  }
  func.func @transform_2(%arg0: i32) -> (i32, i32, i32) {
    %c0_i32 = arith.constant 0 : i32
    %c0_i32_0 = arith.constant 0 : i32
    %c0_i32_1 = arith.constant 0 : i32
    %c0_i32_2 = arith.constant 0 : i32
    return %c0_i32, %c0_i32_0, %c0_i32_1 : i32, i32, i32
  }
  func.func @transform_3(%arg0: i32) -> (i32, i32) {
    %c0_i32 = arith.constant 0 : i32
    %c0_i32_0 = arith.constant 0 : i32
    %c0_i32_1 = arith.constant 0 : i32
    return %c0_i32, %c0_i32_0 : i32, i32
  }
  func.func @transform_4(%arg0: i32) -> (i32, i32) {
    %c0_i32 = arith.constant 0 : i32
    %c0_i32_0 = arith.constant 0 : i32
    return %arg0, %c0_i32 : i32, i32
  }
}

</mosaic_0001>

<llo_original>
// kernel: tpu_custom_call.1
$region0: #{tpu_custom_call.1}
  #allocation0 [shape = 'u32[]', space=smem, size = 0x4, offset = 0x4, fixed_abs, tag = 'smem constant byte address 0x4 - core index']
  #allocation1 [shape = 'u32[72,128]{1,0:T(1,128)}', space=vmem, size = 0x9000, scoped, tag = 'internal scratch']
  %s0 = inlined_call_operand.hbm [shape: f32[8,8], index: 0, kind: input, shape index: {}]
  %s1 = inlined_call_operand.hbm [shape: bf16[8,128], index: 1, kind: input, shape index: {}]
  %s2 = inlined_call_operand.hbm [shape: bf16[8,128,128], index: 2, kind: input, shape index: {}]
  %s3 = inlined_call_operand.hbm [shape: f32[9,128], index: 3, kind: input, shape index: {}]
  %s4 = inlined_call_operand.vmem [shape: f32[8,2], index: 4, kind: output, shape index: {}]
  %s5 = sld [smem:[#allocation0]]
  $region42: #{tpu_custom_call.1} parent=0
    _
  %s7 = ssub.s32 1, %s5
  %s8 = scalar_select 0, %s7, %s5
  $region1: #{tpu_custom_call.1} parent=0
    #allocation2 [shape = 'u8[4096]{0}', space=vmem, size = 0x1000, scoped, tag = 'input window, operand 0, single buffered']
    #allocation3 [shape = 's32[1]{0}', space=sflag, size = 0x4, scoped, tag = 'scoped memory for tpu_custom_call.1']
    #allocation4 [shape = 'u8[2048]{0}', space=vmem, size = 0x800, scoped, tag = 'input window, operand 1, single buffered']
    #allocation5 [shape = 's32[1]{0}', space=sflag, size = 0x4, scoped, tag = 'scoped memory for tpu_custom_call.1']
    #allocation6 [shape = 'u8[262144]{0}', space=vmem, size = 0x40000, scoped, tag = 'input window, operand 2, single buffered']
    #allocation7 [shape = 'u8[8192]{0}', space=vmem, size = 0x2000, scoped, tag = 'input window, operand 3, single buffered']
    #allocation8 [shape = 's32[1]{0}', space=sflag, size = 0x4, scoped, tag = 'scoped memory for tpu_custom_call.1']
    %9 = vsyncpa [#allocation3], 0
    %10 = vsyncpa [#allocation5], 0
    %11 = vsyncpa [#allocation8], 0
    // Predicated region
    $region2: #{tpu_custom_call.1} parent=1 // pred_check
      _
    $region3: #{tpu_custom_call.1} parent=1 // pred_check_branch
      %13 = sbr.rel (0) target = $region5
    $region4: #{tpu_custom_call.1} parent=1 // pred_region
      %15 = vsyncadd [#allocation3], 0
      %s17 = sshll.u32 %s0, 4
      %s18 = int_to_ptr.hbm [resolvable:$true] %s17
      %s19 = sshll.u32 [#allocation2], 4
      %s20 = int_to_ptr.vmem [resolvable:$true] %s19
      %22 = dma.hbm_to_vmem [thread:$0]  %s18, 128, %s20, [#allocation3]
    $region5: #{tpu_custom_call.1} parent=1 // pred_fallthru
      _
    // Predicated region
    $region6: #{tpu_custom_call.1} parent=1 // pred_check
      _
    $region7: #{tpu_custom_call.1} parent=1 // pred_check_branch
      %24 = sbr.rel (0) target = $region9
    $region8: #{tpu_custom_call.1} parent=1 // pred_region
      %26 = vsyncadd [#allocation5], 0
      %s28 = sshll.u32 %s1, 4
      %s29 = int_to_ptr.hbm [resolvable:$true] %s28
      %s30 = sshll.u32 [#allocation4], 4
      %s31 = int_to_ptr.vmem [resolvable:$true] %s30
      %33 = dma.hbm_to_vmem [thread:$0]  %s29, 64, %s31, [#allocation5]
    $region9: #{tpu_custom_call.1} parent=1 // pred_fallthru
      _
    // Predicated region
    $region10: #{tpu_custom_call.1} parent=1 // pred_check
      _
    $region11: #{tpu_custom_call.1} parent=1 // pred_check_branch
      %35 = sbr.rel (0) target = $region13
    $region12: #{tpu_custom_call.1} parent=1 // pred_region
      %37 = vsyncadd [#allocation5], 0
      %s38 = sshll.u32 %s2, 4
      %s39 = int_to_ptr.hbm [resolvable:$true] %s38
      %s40 = sshll.u32 [#allocation6], 4
      %s41 = int_to_ptr.vmem [resolvable:$true] %s40
      %46 = dma.hbm_to_vmem [thread:$0]  %s39, 8192, %s41, [#allocation5], 64, 64, 4
    $region13: #{tpu_custom_call.1} parent=1 // pred_fallthru
      _
    // Predicated region
    $region14: #{tpu_custom_call.1} parent=1 // pred_check
      _
    $region15: #{tpu_custom_call.1} parent=1 // pred_check_branch
      %48 = sbr.rel (0) target = $region17
    $region16: #{tpu_custom_call.1} parent=1 // pred_region
      %50 = vsyncadd [#allocation8], 0
      %s51 = sshll.u32 %s3, 4
      %s52 = int_to_ptr.hbm [resolvable:$true] %s51
      %s53 = sshll.u32 [#allocation7], 4
      %s54 = int_to_ptr.vmem [resolvable:$true] %s53
      %59 = dma.hbm_to_vmem [thread:$0]  %s52, 256, %s54, [#allocation8], 128, 128, 8
    $region17: #{tpu_custom_call.1} parent=1 // pred_fallthru
      _
    // Predicated region
    $region18: #{tpu_custom_call.1} parent=1 // pred_check
      _
    $region19: #{tpu_custom_call.1} parent=1 // pred_check_branch
      %61 = sbr.rel (0) target = $region21
    $region20: #{tpu_custom_call.1} parent=1 // pred_region
      %63 = dma.done [#allocation3], 128
    $region21: #{tpu_custom_call.1} parent=1 // pred_fallthru
      _
    // Predicated region
    $region22: #{tpu_custom_call.1} parent=1 // pred_check
      _
    $region23: #{tpu_custom_call.1} parent=1 // pred_check_branch
      %65 = sbr.rel (0) target = $region25
    $region24: #{tpu_custom_call.1} parent=1 // pred_region
      %67 = dma.done [#allocation5], 64
    $region25: #{tpu_custom_call.1} parent=1 // pred_fallthru
      _
    // Predicated region
    $region26: #{tpu_custom_call.1} parent=1 // pred_check
      _
    $region27: #{tpu_custom_call.1} parent=1 // pred_check_branch
      %69 = sbr.rel (0) target = $region29
    $region28: #{tpu_custom_call.1} parent=1 // pred_region
      %71 = dma.done [#allocation5], 8192
    $region29: #{tpu_custom_call.1} parent=1 // pred_fallthru
      _
    // Predicated region
    $region30: #{tpu_custom_call.1} parent=1 // pred_check
      _
    $region31: #{tpu_custom_call.1} parent=1 // pred_check_branch
      %73 = sbr.rel (0) target = $region33
    $region32: #{tpu_custom_call.1} parent=1 // pred_region
      %75 = dma.done [#allocation8], 256
    $region33: #{tpu_custom_call.1} parent=1 // pred_fallthru
      _
    %v77 = vld [vmem:[#allocation2] sm:$0xff]
    %v78 = vpack.c.bf16 %v77, %v77
    %v79 = vld [vmem:[#allocation4] sm:$0xf]
    %v80 = vld [vmem:[#allocation7] sm:$0x1]
    %v81 = vperm.slane %v80, 0
    %vm82 = vcmask 64512
    %v84 = vsel %vm82, %v78, 0
    %vm86 = vcmask 1043456
    %v88 = vsel %vm86, %v79, 0
    %90 = vmatpush.bf16.msra.mxu0 0
    %91 = vmatpush.bf16.msra.mxu0 0
    %92 = vmatpush.bf16.msra.mxu0 0
    %93 = vmatpush.bf16.msra.mxu0 0
    %94 = vmatpush.bf16.msra.mxu0 0
    %95 = vmatpush.bf16.msra.mxu0 0
    %96 = vmatpush.bf16.msra.mxu0 0
    %97 = vmatpush.bf16.msra.mxu0 %v88
    %98 = vmatmul.bf16.gmra.mxu0 %v84
    %v99 = vpop.f32.mrf.mxu0
    %v100 = vadd.f32 %v81, %v99
    %v101 = vpop.f32.mrf.mxu0
    %102 = vdwg.mxu0
    %v103 = vmax.f32 %v100, 0.0
    %v104 = vpack.c.bf16 %v103, %v103
    %v105 = vld [vmem:[#allocation6] sm:$0xf]
    %v106 = vld [vmem:[#allocation6 + $0x4] sm:$0xf]
    %v107 = vld [vmem:[#allocation6 + $0x8] sm:$0xf]
    %v108 = vld [vmem:[#allocation6 + $0xc] sm:$0xf]
    %v109 = vld [vmem:[#allocation6 + $0x10] sm:$0xf]
    %v110 = vld [vmem:[#allocation6 + $0x14] sm:$0xf]
    %v111 = vld [vmem:[#allocation6 + $0x18] sm:$0xf]
    %v112 = vld [vmem:[#allocation6 + $0x1c] sm:$0xf]
    %v113 = vld [vmem:[#allocation6 + $0x20] sm:$0xf]
    %v114 = vld [vmem:[#allocation6 + $0x24] sm:$0xf]
    %v115 = vld [vmem:[#allocation6 + $0x28] sm:$0xf]
    %v116 = vld [vmem:[#allocation6 + $0x2c] sm:$0xf]
    %v117 = vld [vmem:[#allocation6 + $0x30] sm:$0xf]
    %v118 = vld [vmem:[#allocation6 + $0x34] sm:$0xf]
    %v119 = vld [vmem:[#allocation6 + $0x38] sm:$0xf]
    %v120 = vld [vmem:[#allocation6 + $0x3c] sm:$0xf]
    %v121 = vld [vmem:[#allocation7 + $0x1] sm:$0x1]
    %v122 = vperm.slane %v121, 0
    %v139 = vunpack.c.l.b16 %v105
    %v140 = vunpack.c.l.b16 %v106
    %v141 = vunpack.c.l.b16 %v107
    %v142 = vunpack.c.l.b16 %v108
    %v143 = vunpack.c.l.b16 %v109
    %v144 = vunpack.c.l.b16 %v110
    %v145 = vunpack.c.l.b16 %v111
    %v146 = vunpack.c.l.b16 %v112
    %v147 = vunpack.c.l.b16 %v113
    %v148 = vunpack.c.l.b16 %v114
    %v149 = vunpack.c.l.b16 %v115
    %v150 = vunpack.c.l.b16 %v116
    %v151 = vunpack.c.l.b16 %v117
    %v152 = vunpack.c.l.b16 %v118
    %v153 = vunpack.c.l.b16 %v119
    %v154 = vunpack.c.l.b16 %v120
    %v155 = vpack.c.b16 %v140, %v139
    %v156 = vpack.c.b16 %v142, %v141
    %v157 = vpack.c.b16 %v144, %v143
    %v158 = vpack.c.b16 %v146, %v145
    %v159 = vpack.c.b16 %v148, %v147
    %v160 = vpack.c.b16 %v150, %v149
    %v161 = vpack.c.b16 %v152, %v151
    %v162 = vpack.c.b16 %v154, %v153
    %171 = vmatpush.bf16.msra.mxu0 %v162
    %172 = vmatpush.bf16.msra.mxu0 %v161
    %173 = vmatpush.bf16.msra.mxu0 %v160
    %174 = vmatpush.bf16.msra.mxu0 %v159
    %175 = vmatpush.bf16.msra.mxu0 %v158
    %176 = vmatpush.bf16.msra.mxu0 %v157
    %177 = vmatpush.bf16.msra.mxu0 %v156
    %178 = vmatpush.bf16.msra.mxu0 %v155
    %179 = vmatmul.bf16.gmra.mxu0 %v104
    %v180 = vpop.f32.mrf.mxu0
    %v181 = vadd.f32 %v122, %v180
    %v182 = vpop.f32.mrf.mxu0
    %183 = vdwg.mxu0
    %v184 = vmax.f32 %v181, 0.0
    %v185 = vpack.c.bf16 %v184, %v184
    %s186 = scalar_lea.vmem [#allocation6], 64
    %v187 = vld [vmem:[%s186] sm:$0xf]
    %v188 = vld [vmem:[%s186 + $0x4] sm:$0xf]
    %v189 = vld [vmem:[%s186 + $0x8] sm:$0xf]
    %v190 = vld [vmem:[%s186 + $0xc] sm:$0xf]
    %v191 = vld [vmem:[%s186 + $0x10] sm:$0xf]
    %v192 = vld [vmem:[%s186 + $0x14] sm:$0xf]
    %v193 = vld [vmem:[%s186 + $0x18] sm:$0xf]
    %v194 = vld [vmem:[%s186 + $0x1c] sm:$0xf]
    %v195 = vld [vmem:[%s186 + $0x20] sm:$0xf]
    %v196 = vld [vmem:[%s186 + $0x24] sm:$0xf]
    %v197 = vld [vmem:[%s186 + $0x28] sm:$0xf]
    %v198 = vld [vmem:[%s186 + $0x2c] sm:$0xf]
    %v199 = vld [vmem:[%s186 + $0x30] sm:$0xf]
    %v200 = vld [vmem:[%s186 + $0x34] sm:$0xf]
    %v201 = vld [vmem:[%s186 + $0x38] sm:$0xf]
    %v202 = vld [vmem:[%s186 + $0x3c] sm:$0xf]
    %v203 = vld [vmem:[#allocation7 + $0x2] sm:$0x1]
    %v204 = vperm.slane %v203, 0
    %v221 = vunpack.c.l.b16 %v187
    %v222 = vunpack.c.l.b16 %v188
    %v223 = vunpack.c.l.b16 %v189
    %v224 = vunpack.c.l.b16 %v190
    %v225 = vunpack.c.l.b16 %v191
    %v226 = vunpack.c.l.b16 %v192
    %v227 = vunpack.c.l.b16 %v193
    %v228 = vunpack.c.l.b16 %v194
    %v229 = vunpack.c.l.b16 %v195
    %v230 = vunpack.c.l.b16 %v196
    %v231 = vunpack.c.l.b16 %v197
    %v232 = vunpack.c.l.b16 %v198
    %v233 = vunpack.c.l.b16 %v199
    %v234 = vunpack.c.l.b16 %v200
    %v235 = vunpack.c.l.b16 %v201
    %v236 = vunpack.c.l.b16 %v202
    %v237 = vpack.c.b16 %v222, %v221
    %v238 = vpack.c.b16 %v224, %v223
    %v239 = vpack.c.b16 %v226, %v225
    %v240 = vpack.c.b16 %v228, %v227
    %v241 = vpack.c.b16 %v230, %v229
    %v242 = vpack.c.b16 %v232, %v231
    %v243 = vpack.c.b16 %v234, %v233
    %v244 = vpack.c.b16 %v236, %v235
    %253 = vmatpush.bf16.msra.mxu0 %v244
    %254 = vmatpush.bf16.msra.mxu0 %v243
    %255 = vmatpush.bf16.msra.mxu0 %v242
    %256 = vmatpush.bf16.msra.mxu0 %v241
    %257 = vmatpush.bf16.msra.mxu0 %v240
    %258 = vmatpush.bf16.msra.mxu0 %v239
    %259 = vmatpush.bf16.msra.mxu0 %v238
    %260 = vmatpush.bf16.msra.mxu0 %v237
    %261 = vmatmul.bf16.gmra.mxu0 %v185
    %v262 = vpop.f32.mrf.mxu0
    %v263 = vadd.f32 %v204, %v262
    %v264 = vpop.f32.mrf.mxu0
    %265 = vdwg.mxu0
    %v266 = vmax.f32 %v263, 0.0
    %v267 = vpack.c.bf16 %v266, %v266
    %s268 = scalar_lea.vmem [#allocation6], 128
    %v269 = vld [vmem:[%s268] sm:$0xf]
    %v270 = vld [vmem:[%s268 + $0x4] sm:$0xf]
    %v271 = vld [vmem:[%s268 + $0x8] sm:$0xf]
    %v272 = vld [vmem:[%s268 + $0xc] sm:$0xf]
    %v273 = vld [vmem:[%s268 + $0x10] sm:$0xf]
    %v274 = vld [vmem:[%s268 + $0x14] sm:$0xf]
    %v275 = vld [vmem:[%s268 + $0x18] sm:$0xf]
    %v276 = vld [vmem:[%s268 + $0x1c] sm:$0xf]
    %v277 = vld [vmem:[%s268 + $0x20] sm:$0xf]
    %v278 = vld [vmem:[%s268 + $0x24] sm:$0xf]
    %v279 = vld [vmem:[%s268 + $0x28] sm:$0xf]
    %v280 = vld [vmem:[%s268 + $0x2c] sm:$0xf]
    %v281 = vld [vmem:[%s268 + $0x30] sm:$0xf]
    %v282 = vld [vmem:[%s268 + $0x34] sm:$0xf]
    %v283 = vld [vmem:[%s268 + $0x38] sm:$0xf]
    %v284 = vld [vmem:[%s268 + $0x3c] sm:$0xf]
    %v285 = vld [vmem:[#allocation7 + $0x3] sm:$0x1]
    %v286 = vperm.slane %v285, 0
    %v303 = vunpack.c.l.b16 %v269
    %v304 = vunpack.c.l.b16 %v270
    %v305 = vunpack.c.l.b16 %v271
    %v306 = vunpack.c.l.b16 %v272
    %v307 = vunpack.c.l.b16 %v273
    %v308 = vunpack.c.l.b16 %v274
    %v309 = vunpack.c.l.b16 %v275
    %v310 = vunpack.c.l.b16 %v276
    %v311 = vunpack.c.l.b16 %v277
    %v312 = vunpack.c.l.b16 %v278
    %v313 = vunpack.c.l.b16 %v279
    %v314 = vunpack.c.l.b16 %v280
    %v315 = vunpack.c.l.b16 %v281
    %v316 = vunpack.c.l.b16 %v282
    %v317 = vunpack.c.l.b16 %v283
    %v318 = vunpack.c.l.b16 %v284
    %v319 = vpack.c.b16 %v304, %v303
    %v320 = vpack.c.b16 %v306, %v305
    %v321 = vpack.c.b16 %v308, %v307
    %v322 = vpack.c.b16 %v310, %v309
    %v323 = vpack.c.b16 %v312, %v311
    %v324 = vpack.c.b16 %v314, %v313
    %v325 = vpack.c.b16 %v316, %v315
    %v326 = vpack.c.b16 %v318, %v317
    %335 = vmatpush.bf16.msra.mxu0 %v326
    %336 = vmatpush.bf16.msra.mxu0 %v325
    %337 = vmatpush.bf16.msra.mxu0 %v324
    %338 = vmatpush.bf16.msra.mxu0 %v323
    %339 = vmatpush.bf16.msra.mxu0 %v322
    %340 = vmatpush.bf16.msra.mxu0 %v321
    %341 = vmatpush.bf16.msra.mxu0 %v320
    %342 = vmatpush.bf16.msra.mxu0 %v319
    %343 = vmatmul.bf16.gmra.mxu0 %v267
    %v344 = vpop.f32.mrf.mxu0
    %v345 = vadd.f32 %v286, %v344
    %v346 = vpop.f32.mrf.mxu0
    %347 = vdwg.mxu0
    %v348 = vmax.f32 %v345, 0.0
    %v349 = vpack.c.bf16 %v348, %v348
    %s350 = scalar_lea.vmem [#allocation6], 192
    %v351 = vld [vmem:[%s350] sm:$0xf]
    %v352 = vld [vmem:[%s350 + $0x4] sm:$0xf]
    %v353 = vld [vmem:[%s350 + $0x8] sm:$0xf]
    %v354 = vld [vmem:[%s350 + $0xc] sm:$0xf]
    %v355 = vld [vmem:[%s350 + $0x10] sm:$0xf]
    %v356 = vld [vmem:[%s350 + $0x14] sm:$0xf]
    %v357 = vld [vmem:[%s350 + $0x18] sm:$0xf]
    %v358 = vld [vmem:[%s350 + $0x1c] sm:$0xf]
    %v359 = vld [vmem:[%s350 + $0x20] sm:$0xf]
    %v360 = vld [vmem:[%s350 + $0x24] sm:$0xf]
    %v361 = vld [vmem:[%s350 + $0x28] sm:$0xf]
    %v362 = vld [vmem:[%s350 + $0x2c] sm:$0xf]
    %v363 = vld [vmem:[%s350 + $0x30] sm:$0xf]
    %v364 = vld [vmem:[%s350 + $0x34] sm:$0xf]
    %v365 = vld [vmem:[%s350 + $0x38] sm:$0xf]
    %v366 = vld [vmem:[%s350 + $0x3c] sm:$0xf]
    %v367 = vld [vmem:[#allocation7 + $0x4] sm:$0x1]
    %v368 = vperm.slane %v367, 0
    %v385 = vunpack.c.l.b16 %v351
    %v386 = vunpack.c.l.b16 %v352
    %v387 = vunpack.c.l.b16 %v353
    %v388 = vunpack.c.l.b16 %v354
    %v389 = vunpack.c.l.b16 %v355
    %v390 = vunpack.c.l.b16 %v356
    %v391 = vunpack.c.l.b16 %v357
    %v392 = vunpack.c.l.b16 %v358
    %v393 = vunpack.c.l.b16 %v359
    %v394 = vunpack.c.l.b16 %v360
    %v395 = vunpack.c.l.b16 %v361
    %v396 = vunpack.c.l.b16 %v362
    %v397 = vunpack.c.l.b16 %v363
    %v398 = vunpack.c.l.b16 %v364
    %v399 = vunpack.c.l.b16 %v365
    %v400 = vunpack.c.l.b16 %v366
    %v401 = vpack.c.b16 %v386, %v385
    %v402 = vpack.c.b16 %v388, %v387
    %v403 = vpack.c.b16 %v390, %v389
    %v404 = vpack.c.b16 %v392, %v391
    %v405 = vpack.c.b16 %v394, %v393
    %v406 = vpack.c.b16 %v396, %v395
    %v407 = vpack.c.b16 %v398, %v397
    %v408 = vpack.c.b16 %v400, %v399
    %417 = vmatpush.bf16.msra.mxu0 %v408
    %418 = vmatpush.bf16.msra.mxu0 %v407
    %419 = vmatpush.bf16.msra.mxu0 %v406
    %420 = vmatpush.bf16.msra.mxu0 %v405
    %421 = vmatpush.bf16.msra.mxu0 %v404
    %422 = vmatpush.bf16.msra.mxu0 %v403
    %423 = vmatpush.bf16.msra.mxu0 %v402
    %424 = vmatpush.bf16.msra.mxu0 %v401
    %425 = vmatmul.bf16.gmra.mxu0 %v349
    %v426 = vpop.f32.mrf.mxu0
    %v427 = vadd.f32 %v368, %v426
    %v428 = vpop.f32.mrf.mxu0
    %429 = vdwg.mxu0
    %v430 = vmax.f32 %v427, 0.0
    %v431 = vpack.c.bf16 %v430, %v430
    %s432 = scalar_lea.vmem [#allocation6], 256
    %v433 = vld [vmem:[%s432] sm:$0xf]
    %v434 = vld [vmem:[%s432 + $0x4] sm:$0xf]
    %v435 = vld [vmem:[%s432 + $0x8] sm:$0xf]
    %v436 = vld [vmem:[%s432 + $0xc] sm:$0xf]
    %v437 = vld [vmem:[%s432 + $0x10] sm:$0xf]
    %v438 = vld [vmem:[%s432 + $0x14] sm:$0xf]
    %v439 = vld [vmem:[%s432 + $0x18] sm:$0xf]
    %v440 = vld [vmem:[%s432 + $0x1c] sm:$0xf]
    %v441 = vld [vmem:[%s432 + $0x20] sm:$0xf]
    %v442 = vld [vmem:[%s432 + $0x24] sm:$0xf]
    %v443 = vld [vmem:[%s432 + $0x28] sm:$0xf]
    %v444 = vld [vmem:[%s432 + $0x2c] sm:$0xf]
    %v445 = vld [vmem:[%s432 + $0x30] sm:$0xf]
    %v446 = vld [vmem:[%s432 + $0x34] sm:$0xf]
    %v447 = vld [vmem:[%s432 + $0x38] sm:$0xf]
    %v448 = vld [vmem:[%s432 + $0x3c] sm:$0xf]
    %v449 = vld [vmem:[#allocation7 + $0x5] sm:$0x1]
    %v450 = vperm.slane %v449, 0
    %v467 = vunpack.c.l.b16 %v433
    %v468 = vunpack.c.l.b16 %v434
    %v469 = vunpack.c.l.b16 %v435
    %v470 = vunpack.c.l.b16 %v436
    %v471 = vunpack.c.l.b16 %v437
    %v472 = vunpack.c.l.b16 %v438
    %v473 = vunpack.c.l.b16 %v439
    %v474 = vunpack.c.l.b16 %v440
    %v475 = vunpack.c.l.b16 %v441
    %v476 = vunpack.c.l.b16 %v442
    %v477 = vunpack.c.l.b16 %v443
    %v478 = vunpack.c.l.b16 %v444
    %v479 = vunpack.c.l.b16 %v445
    %v480 = vunpack.c.l.b16 %v446
    %v481 = vunpack.c.l.b16 %v447
    %v482 = vunpack.c.l.b16 %v448
    %v483 = vpack.c.b16 %v468, %v467
    %v484 = vpack.c.b16 %v470, %v469
    %v485 = vpack.c.b16 %v472, %v471
    %v486 = vpack.c.b16 %v474, %v473
    %v487 = vpack.c.b16 %v476, %v475
    %v488 = vpack.c.b16 %v478, %v477
    %v489 = vpack.c.b16 %v480, %v479
    %v490 = vpack.c.b16 %v482, %v481
    %499 = vmatpush.bf16.msra.mxu0 %v490
    %500 = vmatpush.bf16.msra.mxu0 %v489
    %501 = vmatpush.bf16.msra.mxu0 %v488
    %502 = vmatpush.bf16.msra.mxu0 %v487
    %503 = vmatpush.bf16.msra.mxu0 %v486
    %504 = vmatpush.bf16.msra.mxu0 %v485
    %505 = vmatpush.bf16.msra.mxu0 %v484
    %506 = vmatpush.bf16.msra.mxu0 %v483
    %507 = vmatmul.bf16.gmra.mxu0 %v431
    %v508 = vpop.f32.mrf.mxu0
    %v509 = vadd.f32 %v450, %v508
    %v510 = vpop.f32.mrf.mxu0
    %511 = vdwg.mxu0
    %v512 = vmax.f32 %v509, 0.0
    %v513 = vpack.c.bf16 %v512, %v512
    %s514 = scalar_lea.vmem [#allocation6], 320
    %v515 = vld [vmem:[%s514] sm:$0xf]
    %v516 = vld [vmem:[%s514 + $0x4] sm:$0xf]
    %v517 = vld [vmem:[%s514 + $0x8] sm:$0xf]
    %v518 = vld [vmem:[%s514 + $0xc] sm:$0xf]
    %v519 = vld [vmem:[%s514 + $0x10] sm:$0xf]
    %v520 = vld [vmem:[%s514 + $0x14] sm:$0xf]
    %v521 = vld [vmem:[%s514 + $0x18] sm:$0xf]
    %v522 = vld [vmem:[%s514 + $0x1c] sm:$0xf]
    %v523 = vld [vmem:[%s514 + $0x20] sm:$0xf]
    %v524 = vld [vmem:[%s514 + $0x24] sm:$0xf]
    %v525 = vld [vmem:[%s514 + $0x28] sm:$0xf]
    %v526 = vld [vmem:[%s514 + $0x2c] sm:$0xf]
    %v527 = vld [vmem:[%s514 + $0x30] sm:$0xf]
    %v528 = vld [vmem:[%s514 + $0x34] sm:$0xf]
    %v529 = vld [vmem:[%s514 + $0x38] sm:$0xf]
    %v530 = vld [vmem:[%s514 + $0x3c] sm:$0xf]
    %v531 = vld [vmem:[#allocation7 + $0x6] sm:$0x1]
    %v532 = vperm.slane %v531, 0
    %v549 = vunpack.c.l.b16 %v515
    %v550 = vunpack.c.l.b16 %v516
    %v551 = vunpack.c.l.b16 %v517
    %v552 = vunpack.c.l.b16 %v518
    %v553 = vunpack.c.l.b16 %v519
    %v554 = vunpack.c.l.b16 %v520
    %v555 = vunpack.c.l.b16 %v521
    %v556 = vunpack.c.l.b16 %v522
    %v557 = vunpack.c.l.b16 %v523
    %v558 = vunpack.c.l.b16 %v524
    %v559 = vunpack.c.l.b16 %v525
    %v560 = vunpack.c.l.b16 %v526
    %v561 = vunpack.c.l.b16 %v527
    %v562 = vunpack.c.l.b16 %v528
    %v563 = vunpack.c.l.b16 %v529
    %v564 = vunpack.c.l.b16 %v530
    %v565 = vpack.c.b16 %v550, %v549
    %v566 = vpack.c.b16 %v552, %v551
    %v567 = vpack.c.b16 %v554, %v553
    %v568 = vpack.c.b16 %v556, %v555
    %v569 = vpack.c.b16 %v558, %v557
    %v570 = vpack.c.b16 %v560, %v559
    %v571 = vpack.c.b16 %v562, %v561
    %v572 = vpack.c.b16 %v564, %v563
    %581 = vmatpush.bf16.msra.mxu0 %v572
    %582 = vmatpush.bf16.msra.mxu0 %v571
    %583 = vmatpush.bf16.msra.mxu0 %v570
    %584 = vmatpush.bf16.msra.mxu0 %v569
    %585 = vmatpush.bf16.msra.mxu0 %v568
    %586 = vmatpush.bf16.msra.mxu0 %v567
    %587 = vmatpush.bf16.msra.mxu0 %v566
    %588 = vmatpush.bf16.msra.mxu0 %v565
    %589 = vmatmul.bf16.gmra.mxu0 %v513
    %v590 = vpop.f32.mrf.mxu0
    %v591 = vadd.f32 %v532, %v590
    %v592 = vpop.f32.mrf.mxu0
    %593 = vdwg.mxu0
    %v594 = vmax.f32 %v591, 0.0
    %v595 = vpack.c.bf16 %v594, %v594
    %s596 = scalar_lea.vmem [#allocation6], 384
    %v597 = vld [vmem:[%s596] sm:$0xf]
    %v598 = vld [vmem:[%s596 + $0x4] sm:$0xf]
    %v599 = vld [vmem:[%s596 + $0x8] sm:$0xf]
    %v600 = vld [vmem:[%s596 + $0xc] sm:$0xf]
    %v601 = vld [vmem:[%s596 + $0x10] sm:$0xf]
    %v602 = vld [vmem:[%s596 + $0x14] sm:$0xf]
    %v603 = vld [vmem:[%s596 + $0x18] sm:$0xf]
    %v604 = vld [vmem:[%s596 + $0x1c] sm:$0xf]
    %v605 = vld [vmem:[%s596 + $0x20] sm:$0xf]
    %v606 = vld [vmem:[%s596 + $0x24] sm:$0xf]
    %v607 = vld [vmem:[%s596 + $0x28] sm:$0xf]
    %v608 = vld [vmem:[%s596 + $0x2c] sm:$0xf]
    %v609 = vld [vmem:[%s596 + $0x30] sm:$0xf]
    %v610 = vld [vmem:[%s596 + $0x34] sm:$0xf]
    %v611 = vld [vmem:[%s596 + $0x38] sm:$0xf]
    %v612 = vld [vmem:[%s596 + $0x3c] sm:$0xf]
    %v613 = vld [vmem:[#allocation7 + $0x7] sm:$0x1]
    %v614 = vperm.slane %v613, 0
    %v631 = vunpack.c.l.b16 %v597
    %v632 = vunpack.c.l.b16 %v598
    %v633 = vunpack.c.l.b16 %v599
    %v634 = vunpack.c.l.b16 %v600
    %v635 = vunpack.c.l.b16 %v601
    %v636 = vunpack.c.l.b16 %v602
    %v637 = vunpack.c.l.b16 %v603
    %v638 = vunpack.c.l.b16 %v604
    %v639 = vunpack.c.l.b16 %v605
    %v640 = vunpack.c.l.b16 %v606
    %v641 = vunpack.c.l.b16 %v607
    %v642 = vunpack.c.l.b16 %v608
    %v643 = vunpack.c.l.b16 %v609
    %v644 = vunpack.c.l.b16 %v610
    %v645 = vunpack.c.l.b16 %v611
    %v646 = vunpack.c.l.b16 %v612
    %v647 = vpack.c.b16 %v632, %v631
    %v648 = vpack.c.b16 %v634, %v633
    %v649 = vpack.c.b16 %v636, %v635
    %v650 = vpack.c.b16 %v638, %v637
    %v651 = vpack.c.b16 %v640, %v639
    %v652 = vpack.c.b16 %v642, %v641
    %v653 = vpack.c.b16 %v644, %v643
    %v654 = vpack.c.b16 %v646, %v645
    %663 = vmatpush.bf16.msra.mxu0 %v654
    %664 = vmatpush.bf16.msra.mxu0 %v653
    %665 = vmatpush.bf16.msra.mxu0 %v652
    %666 = vmatpush.bf16.msra.mxu0 %v651
    %667 = vmatpush.bf16.msra.mxu0 %v650
    %668 = vmatpush.bf16.msra.mxu0 %v649
    %669 = vmatpush.bf16.msra.mxu0 %v648
    %670 = vmatpush.bf16.msra.mxu0 %v647
    %671 = vmatmul.bf16.gmra.mxu0 %v595
    %v672 = vpop.f32.mrf.mxu0
    %v673 = vadd.f32 %v614, %v672
    %v674 = vpop.f32.mrf.mxu0
    %675 = vdwg.mxu0
    %v676 = vmax.f32 %v673, 0.0
    %v677 = vpack.c.bf16 %v676, %v676
    %s678 = scalar_lea.vmem [#allocation6], 448
    %v679 = vld [vmem:[%s678] sm:$0xf]
    %v680 = vld [vmem:[%s678 + $0x4] sm:$0xf]
    %v681 = vld [vmem:[%s678 + $0x8] sm:$0xf]
    %v682 = vld [vmem:[%s678 + $0xc] sm:$0xf]
    %v683 = vld [vmem:[%s678 + $0x10] sm:$0xf]
    %v684 = vld [vmem:[%s678 + $0x14] sm:$0xf]
    %v685 = vld [vmem:[%s678 + $0x18] sm:$0xf]
    %v686 = vld [vmem:[%s678 + $0x1c] sm:$0xf]
    %v687 = vld [vmem:[%s678 + $0x20] sm:$0xf]
    %v688 = vld [vmem:[%s678 + $0x24] sm:$0xf]
    %v689 = vld [vmem:[%s678 + $0x28] sm:$0xf]
    %v690 = vld [vmem:[%s678 + $0x2c] sm:$0xf]
    %v691 = vld [vmem:[%s678 + $0x30] sm:$0xf]
    %v692 = vld [vmem:[%s678 + $0x34] sm:$0xf]
    %v693 = vld [vmem:[%s678 + $0x38] sm:$0xf]
    %v694 = vld [vmem:[%s678 + $0x3c] sm:$0xf]
    %v695 = vld [vmem:[#allocation7 + $0x8] sm:$0x1]
    %v696 = vperm.slane %v695, 0
    %v713 = vunpack.c.l.b16 %v679
    %v714 = vunpack.c.l.b16 %v680
    %v715 = vunpack.c.l.b16 %v681
    %v716 = vunpack.c.l.b16 %v682
    %v717 = vunpack.c.l.b16 %v683
    %v718 = vunpack.c.l.b16 %v684
    %v719 = vunpack.c.l.b16 %v685
    %v720 = vunpack.c.l.b16 %v686
    %v721 = vunpack.c.l.b16 %v687
    %v722 = vunpack.c.l.b16 %v688
    %v723 = vunpack.c.l.b16 %v689
    %v724 = vunpack.c.l.b16 %v690
    %v725 = vunpack.c.l.b16 %v691
    %v726 = vunpack.c.l.b16 %v692
    %v727 = vunpack.c.l.b16 %v693
    %v728 = vunpack.c.l.b16 %v694
    %v729 = vpack.c.b16 %v714, %v713
    %v730 = vpack.c.b16 %v716, %v715
    %v731 = vpack.c.b16 %v718, %v717
    %v732 = vpack.c.b16 %v720, %v719
    %v733 = vpack.c.b16 %v722, %v721
    %v734 = vpack.c.b16 %v724, %v723
    %v735 = vpack.c.b16 %v726, %v725
    %v736 = vpack.c.b16 %v728, %v727
    %745 = vmatpush.bf16.msra.mxu0 %v736
    %746 = vmatpush.bf16.msra.mxu0 %v735
    %747 = vmatpush.bf16.msra.mxu0 %v734
    %748 = vmatpush.bf16.msra.mxu0 %v733
    %749 = vmatpush.bf16.msra.mxu0 %v732
    %750 = vmatpush.bf16.msra.mxu0 %v731
    %751 = vmatpush.bf16.msra.mxu0 %v730
    %752 = vmatpush.bf16.msra.mxu0 %v729
    %753 = vmatmul.bf16.gmra.mxu0 %v677
    %v754 = vpop.f32.mrf.mxu0
    %v755 = vadd.f32 %v696, %v754
    %v756 = vpop.f32.mrf.mxu0
    %757 = vdwg.mxu0
    %vm758 = vcmask 15360
    %759 = vst.msk [vmem:[%s4] sm:$0xff] %vm758, %v755
    // Predicated region
    $region34: #{tpu_custom_call.1} parent=1 // pred_check
      _
    $region35: #{tpu_custom_call.1} parent=1 // pred_check_branch
      %761 = sbr.rel (0) target = $region37
    $region36: #{tpu_custom_call.1} parent=1 // pred_region
      _
    $region37: #{tpu_custom_call.1} parent=1 // pred_fallthru
      _
    // Predicated region
    $region38: #{tpu_custom_call.1} parent=1 // pred_check
      _
    $region39: #{tpu_custom_call.1} parent=1 // pred_check_branch
      %763 = sbr.rel (0) target = $region41
    $region40: #{tpu_custom_call.1} parent=1 // pred_region
      _
    $region41: #{tpu_custom_call.1} parent=1 // pred_fallthru
      _
    %764 = vsyncpa [#allocation3], 1
    %765 = vsyncpa [#allocation5], 1
    %766 = vsyncpa [#allocation8], 1

</llo_original>
